<compile_context>
chip_gen: v5e
topology: v5e:2x2
jax: 0.10.0
libtpu: 0.0.40
codegen_flags: <defaults>
</compile_context>

<pallas_src>
import functools

import jax
import jax.numpy as jnp
from jax import lax
from jax.experimental import pallas as pl
from jax.experimental.pallas import tpu as pltpu


def _round_up(x: int, m: int) -> int:
    return (x + m - 1) // m * m


def _distill_kernel(s_ref, t_ref, w_ref, b_ref, out_ref, *,
                    m_total: int, tm: int, need_mask: bool):
    # s_ref: (L, tm, S_dim)    t_ref: (L, tm, T_dim)
    # w_ref: (L, T_dim, S_dim) b_ref: (L, 1, T_dim)    out_ref: (1, 8, 128)

    # Batched MXU matmul in the inputs' native layout; f32 accumulation;
    # HIGHEST precision is hidden under the HBM DMAs.
    y = jnp.einsum(
        "lms,lts->lmt", s_ref[...], w_ref[...],
        preferred_element_type=jnp.float32,
        precision=lax.Precision.HIGHEST)                 # (L, tm, T_dim)

    d = (y + b_ref[...].astype(jnp.float32)) - t_ref[...].astype(jnp.float32)
    sq = d * d                                           # pure VPU

    if need_mask:
        # M was padded up to a tile multiple: mask padded rows before the
        # reduce (otherwise d == bias on those rows and sum(b^2) leaks in).
        row = (pl.program_id(0) * tm
               + lax.broadcasted_iota(jnp.int32, (1, tm, 1), 1))
        sq = jnp.where(row < m_total, sq, 0.0)

    # One full (XLU) reduce per tile; lane-dense single-vreg store.
    out_ref[...] = jnp.broadcast_to(jnp.sum(sq), (1, 8, 128))


def attention_distillation_loss(student_stack, teacher_stack, weights_oi,
                                biases, *, use_bf16: bool = False):
    """student_stack: (L, M, S_dim)   teacher_stack: (L, M, T_dim)
       weights_oi:    (L, T_dim, S_dim)  (PyTorch nn.Linear [out, in])
       biases:        (L, T_dim)
       returns scalar f32: mean over L layers of each layer's MSE."""
    L, M, S_dim = student_stack.shape
    T_dim = teacher_stack.shape[-1]

    if use_bf16:
        # Halves HBM traffic of a memory-bound kernel; accumulation stays f32.
        student_stack = student_stack.astype(jnp.bfloat16)
        teacher_stack = teacher_stack.astype(jnp.bfloat16)
        weights_oi = weights_oi.astype(jnp.bfloat16)

    b3 = biases.reshape(L, 1, T_dim).astype(jnp.float32)

    # ---- M tiling: sublane-aligned; >= 2 grid steps whenever M allows it
    # (v7x megacore); tiles capped at 512 rows (VMEM-safe on v7x's 64 MiB
    # even at L=12 with lane-padded dim-8/16 blocks and double buffering).
    m8 = _round_up(M, 8)
    if m8 >= 1024:
        tm = 512
    elif m8 >= 16:
        tm = _round_up((m8 + 1) // 2, 8)    # exactly 2 tiles
    else:
        tm = m8                             # single tiny tile
    m_pad = _round_up(m8, tm)
    num_tiles = m_pad // tm

    if m_pad != M:
        pad = m_pad - M
        student_stack = jnp.pad(student_stack, ((0, 0), (0, pad), (0, 0)))
        teacher_stack = jnp.pad(teacher_stack, ((0, 0), (0, pad), (0, 0)))

    kernel = functools.partial(
        _distill_kernel, m_total=M, tm=tm, need_mask=(m_pad != M))

    partials = pl.pallas_call(
        kernel,
        out_shape=jax.ShapeDtypeStruct((num_tiles, 8, 128), jnp.float32),
        grid_spec=pltpu.PrefetchScalarGridSpec(
            num_scalar_prefetch=0,
            grid=(num_tiles,),
            in_specs=[
                # Native layouts, tiled along M only.
                pl.BlockSpec((L, tm, S_dim), lambda i: (0, i, 0)),
                pl.BlockSpec((L, tm, T_dim), lambda i: (0, i, 0)),
                # Whole weight/bias slabs, same block every step -> one DMA,
                # VMEM-resident for the full run.
                pl.BlockSpec((L, T_dim, S_dim), lambda i: (0, 0, 0)),
                pl.BlockSpec((L, 1, T_dim), lambda i: (0, 0, 0)),
            ],
            out_specs=pl.BlockSpec((1, 8, 128), lambda i: (i, 0, 0)),
        ),
        compiler_params=pltpu.CompilerParams(
            dimension_semantics=("parallel",)),
    )(student_stack, teacher_stack, weights_oi, b3)

    # Tiny finalize in plain JAX: sum per-tile partials, one divide.
    total = jnp.sum(partials[:, 0, 0])
    return total / jnp.float32(M * T_dim * L)


def _reference_loss(student_stack, teacher_stack, weights_oi, biases):
    L = student_stack.shape[0]
    total = 0.0
    for l in range(L):
        y = jnp.matmul(student_stack[l], weights_oi[l].T,
                       precision=lax.Precision.HIGHEST) + biases[l][None, :]
        total = total + jnp.mean((y - teacher_stack[l]) ** 2)
    return total / L


if __name__ == "__main__":
    # Module config: nn.Linear(student_layers, teacher_layers) x 12; forward
    # uses as many of them as there are attention tensors in the lists.
    student_layers = 8     # feature dim of student attention tensors
    teacher_layers = 16    # feature dim of teacher attention tensors
    num_distill = 4        # number of (s_att, t_att) pairs used (<= 12)
    B, S = 2, 8            # batch, sequence -> M = B*S rows per tensor
    M = B * S

    key = jax.random.PRNGKey(0)
    k_s, k_t, k_w, k_b = jax.random.split(key, 4)

    # Deterministic synthetic parameters for the first `num_distill` of the 12
    # transfer Linears, kept in PyTorch's native [out, in] weight layout.
    weights_oi = jax.random.normal(
        k_w, (num_distill, teacher_layers, student_layers),
        dtype=jnp.float32) * 0.1
    biases = jax.random.normal(
        k_b, (num_distill, teacher_layers), dtype=jnp.float32) * 0.1

    # Inputs: lists of attention tensors, stacked on a leading layer axis.
    student_stack = jax.random.normal(
        k_s, (num_distill, M, student_layers), dtype=jnp.float32)
    teacher_stack = jax.random.normal(
        k_t, (num_distill, M, teacher_layers), dtype=jnp.float32)

    loss = attention_distillation_loss(student_stack, teacher_stack,
                                       weights_oi, biases)
    loss = jax.block_until_ready(loss)

    ref = _reference_loss(student_stack, teacher_stack, weights_oi, biases)
    assert jnp.allclose(loss, ref, rtol=2e-5, atol=1e-5), (loss, ref)

    print("KERNEL_OK")
</pallas_src>

<mosaic_0001>
module attributes {stable_mosaic.version = 11 : i64} {
  func.func @_distill_kernel(%arg0: i32, %arg1: memref<4x8x8xf32, #tpu.memory_space<vmem>>, %arg2: memref<4x8x16xf32, #tpu.memory_space<vmem>>, %arg3: memref<4x16x8xf32, #tpu.memory_space<vmem>>, %arg4: memref<4x1x16xf32, #tpu.memory_space<vmem>>, %arg5: memref<1x8x128xf32, #tpu.memory_space<vmem>>) attributes {dimension_semantics = [#tpu.dimension_semantics<parallel>], iteration_bounds = array<i64: 2>, scalar_prefetch = 0 : i64, scratch_operands = 0 : i64, tpu.core_type = #tpu.core_type<tc>, window_params = [{transform_indices = @transform_0, window_bounds = array<i64: 4, 8, 8>}, {transform_indices = @transform_1, window_bounds = array<i64: 4, 8, 16>}, {pipeline_mode = #tpu.pipeline_mode<synchronous>, transform_indices = @transform_2, window_bounds = array<i64: 4, 16, 8>}, {pipeline_mode = #tpu.pipeline_mode<synchronous>, transform_indices = @transform_3, window_bounds = array<i64: 4, 1, 16>}, {transform_indices = @transform_4, window_bounds = array<i64: 1, 8, 128>}]} {
    %c0 = arith.constant 0 : index
    %c0_0 = arith.constant 0 : index
    %c0_1 = arith.constant 0 : index
    %0 = vector.load %arg1[%c0, %c0_0, %c0_1] : memref<4x8x8xf32, #tpu.memory_space<vmem>>, vector<4x8x8xf32>
    %c0_2 = arith.constant 0 : index
    %c0_3 = arith.constant 0 : index
    %c0_4 = arith.constant 0 : index
    %1 = vector.load %arg3[%c0_2, %c0_3, %c0_4] : memref<4x16x8xf32, #tpu.memory_space<vmem>>, vector<4x16x8xf32>
    "tpu.trace_start"() <{level = 10 : i32, message = "lms,lts->lmt"}> : () -> ()
    %cst = arith.constant dense<0.000000e+00> : vector<4x8x16xf32>
    %2 = tpu.matmul %0, %1, %cst {dimension_numbers = #tpu.dot_dimension_numbers<[2], [2], [1], [1], [0, 0, 0, 1, 1, 1], [0], [0]>, precision = #tpu.contract_precision<fp32>} : vector<4x8x8xf32>, vector<4x16x8xf32>, vector<4x8x16xf32> -> vector<4x8x16xf32>
    "tpu.trace_stop"() : () -> ()
    %c0_5 = arith.constant 0 : index
    %c0_6 = arith.constant 0 : index
    %c0_7 = arith.constant 0 : index
    %3 = vector.load %arg4[%c0_5, %c0_6, %c0_7] : memref<4x1x16xf32, #tpu.memory_space<vmem>>, vector<4x1x16xf32>
    %4 = vector.broadcast %3 : vector<4x1x16xf32> to vector<4x8x16xf32>
    %5 = arith.addf %2, %4 : vector<4x8x16xf32>
    %c0_8 = arith.constant 0 : index
    %c0_9 = arith.constant 0 : index
    %c0_10 = arith.constant 0 : index
    %6 = vector.load %arg2[%c0_8, %c0_9, %c0_10] : memref<4x8x16xf32, #tpu.memory_space<vmem>>, vector<4x8x16xf32>
    %7 = arith.subf %5, %6 : vector<4x8x16xf32>
    %8 = arith.mulf %7, %7 : vector<4x8x16xf32>
    %9 = vector.shape_cast %8 : vector<4x8x16xf32> to vector<1x4x8x16xf32>
    %cst_11 = arith.constant dense<0.000000e+00> : vector<1xf32>
    %10 = vector.multi_reduction <add>, %9, %cst_11 [1, 2, 3] : vector<1x4x8x16xf32> to vector<1xf32>
    %11 = vector.shape_cast %10 : vector<1xf32> to vector<1x1x1x1xf32>
    %12 = vector.extract %11[0, 0, 0, 0] : f32 from vector<1x1x1x1xf32>
    %13 = vector.broadcast %12 : f32 to vector<1x8x128xf32>
    %c0_12 = arith.constant 0 : index
    %c0_13 = arith.constant 0 : index
    %c0_14 = arith.constant 0 : index
    %14 = vector.load %arg5[%c0_12, %c0_13, %c0_14] : memref<1x8x128xf32, #tpu.memory_space<vmem>>, vector<1x8x128xf32>
    tpu.vector_store %arg5[%c0_12, %c0_13, %c0_14], %13 {strides = array<i32>} : memref<1x8x128xf32, #tpu.memory_space<vmem>>, vector<1x8x128xf32>,
    return
  }
  func.func @transform_0(%arg0: i32) -> (i32, i32, i32) {
    %c0_i32 = arith.constant 0 : i32
    %c0_i32_0 = arith.constant 0 : i32
    %c0_i32_1 = arith.constant 0 : i32
    return %c0_i32, %arg0, %c0_i32_0 : i32, i32, i32
  }
  func.func @transform_1(%arg0: i32) -> (i32, i32, i32) {
    %c0_i32 = arith.constant 0 : i32
    %c0_i32_0 = arith.constant 0 : i32
    %c0_i32_1 = arith.constant 0 : i32
    return %c0_i32, %arg0, %c0_i32_0 : i32, i32, i32
  }
  func.func @transform_2(%arg0: i32) -> (i32, i32, i32) {
    %c0_i32 = arith.constant 0 : i32
    %c0_i32_0 = arith.constant 0 : i32
    %c0_i32_1 = arith.constant 0 : i32
    %c0_i32_2 = arith.constant 0 : i32
    return %c0_i32, %c0_i32_0, %c0_i32_1 : i32, i32, i32
  }
  func.func @transform_3(%arg0: i32) -> (i32, i32, i32) {
    %c0_i32 = arith.constant 0 : i32
    %c0_i32_0 = arith.constant 0 : i32
    %c0_i32_1 = arith.constant 0 : i32
    %c0_i32_2 = arith.constant 0 : i32
    return %c0_i32, %c0_i32_0, %c0_i32_1 : i32, i32, i32
  }
  func.func @transform_4(%arg0: i32) -> (i32, i32, i32) {
    %c0_i32 = arith.constant 0 : i32
    %c0_i32_0 = arith.constant 0 : i32
    %c0_i32_1 = arith.constant 0 : i32
    return %arg0, %c0_i32, %c0_i32_0 : i32, i32, i32
  }
}

</mosaic_0001>

<llo_original>
// kernel: tpu_custom_call.1
$region0: #{tpu_custom_call.1}
  #allocation0 [shape = 'u32[]', space=smem, size = 0x4, offset = 0x4, fixed_abs, tag = 'smem constant byte address 0x4 - core index']
  #allocation1 [shape = 'u32[72,128]{1,0:T(1,128)}', space=vmem, size = 0x9000, scoped, tag = 'internal scratch']
  %s0 = inlined_call_operand.vmem [shape: f32[4,16,8], index: 0, kind: input, shape index: {}]
  %s1 = inlined_call_operand.vmem [shape: f32[4,16,16], index: 1, kind: input, shape index: {}]
  %s2 = inlined_call_operand.vmem [shape: f32[4,16,8], index: 2, kind: input, shape index: {}]
  %s3 = inlined_call_operand.vmem [shape: f32[4,1,16], index: 3, kind: input, shape index: {}]
  %s4 = inlined_call_operand.hbm [shape: f32[2,8,128], index: 4, kind: output, shape index: {}]
  %s5 = sld [smem:[#allocation0]]
  $region125: #{tpu_custom_call.1} parent=0
    _
  %s7 = ssub.s32 1, %s5
  %s8 = scalar_select 0, %s7, %s5
  $region1: #{tpu_custom_call.1} parent=0
    #allocation2 [shape = 'u8[32768]{0}', space=vmem, size = 0x8000, scoped, tag = 'input window, operand 0']
    #allocation3 [shape = 'u8[32768]{0}', space=vmem, size = 0x8000, scoped, tag = 'input window, operand 1']
    #allocation4 [shape = 'u8[8192]{0}', space=vmem, size = 0x2000, scoped, tag = 'output window, operand 0']
    #allocation5 [shape = 's32[2]{0}', space=sflag, size = 0x8, scoped, tag = 'scoped memory for tpu_custom_call.1']
    %9 = vsyncpa [#allocation5], 0
    %s10 = scalar_lea.sflag [#allocation5], 1
    %11 = vsyncpa %s10, 0
    loop: start=0, step=1, limit=4
    $region2: #{tpu_custom_call.1} parent=1 // loop_pre_header
      _
    $region3: #{tpu_custom_call.1} parent=1 // loop_header
      %s13 = sphi 0, %s17
      %p14 = scmp.ge.s32.totalorder %s13, 4
      %s23 = sphi 0, %s25
      %s26 = sphi 0, %s23
      %s27 = sphi 0, %s26
      %s43 = sphi 0, %s27
      %s49 = sphi 0, %s51
      %s52 = sphi 0, %s49
      %s53 = sphi 0, %s52
      %s69 = sphi 0, %s53
      %s73 = sphi 0, %s73
      %s75 = sphi 0, %s73
      %s76 = sphi 0, %s75
      %s90 = sphi 0, %s76
      %s94 = sphi 0, %s94
      %s96 = sphi 0, %s94
      %s97 = sphi 0, %s96
      %s111 = sphi 0, %s97
      %s117 = sphi 0, %s119
      %s120 = sphi 0, %s117
      %s121 = sphi 0, %s120
      %s137 = sphi 0, %s121
    $region4: #{tpu_custom_call.1} parent=1 // loop_header_branch
      %16 = sbr.rel (%p14) target = $region8
    $region5: #{tpu_custom_call.1} parent=1 // loop_body
      %s18 = ssub.s32 %s13, 1
      %s19 = ssub.s32 %s13, 2
      %s20 = sadd.s32 %s13, 1
      %s21 = ssub.s32 %s13, %s20
      %p22 = scmp.eq.s32.totalorder %s21, 0
      %s24 = sadd.s32 %s23, 1
      %s25 = scalar_select %p22, %s23, %s24
      %p28 = pneg %p22
      %p29 = scmp.eq.s32.totalorder %s13, 1
      %p30 = por %p28, %p29
      %p31 = scmp.ne.s32.totalorder %s23, %s26
      %p32 = scmp.eq.s32.totalorder %s13, 0
      %p33 = por %p31, %p32
      %p34 = scmp.ne.s32.totalorder %s23, %s26
      %p35 = scmp.eq.s32.totalorder %s18, 1
      %p36 = por %p34, %p35
      %p37 = scmp.ne.s32.totalorder %s26, %s27
      %p38 = scmp.eq.s32.totalorder %s18, 0
      %p39 = por %p37, %p38
      %p40 = scmp.ne.s32.totalorder %s26, %s27
      %p41 = scmp.eq.s32.totalorder %s19, 1
      %p42 = por %p40, %p41
      %p44 = scmp.ne.s32.totalorder %s27, %s43
      %p45 = scmp.eq.s32.totalorder %s19, 0
      %p46 = por %p44, %p45
      %s47 = ssub.s32 %s13, %s20
      %p48 = scmp.eq.s32.totalorder %s47, 0
      %s50 = sadd.s32 %s49, 1
      %s51 = scalar_select %p48, %s49, %s50
      %p54 = pneg %p48
      %p55 = scmp.eq.s32.totalorder %s13, 1
      %p56 = por %p54, %p55
      %p57 = scmp.ne.s32.totalorder %s49, %s52
      %p58 = scmp.eq.s32.totalorder %s13, 0
      %p59 = por %p57, %p58
      %p60 = scmp.ne.s32.totalorder %s49, %s52
      %p61 = scmp.eq.s32.totalorder %s18, 1
      %p62 = por %p60, %p61
      %p63 = scmp.ne.s32.totalorder %s52, %s53
      %p64 = scmp.eq.s32.totalorder %s18, 0
      %p65 = por %p63, %p64
      %p66 = scmp.ne.s32.totalorder %s52, %s53
      %p67 = scmp.eq.s32.totalorder %s19, 1
      %p68 = por %p66, %p67
      %p70 = scmp.ne.s32.totalorder %s53, %s69
      %p71 = scmp.eq.s32.totalorder %s19, 0
      %p72 = por %p70, %p71
      %s74 = sadd.s32 %s73, 1
      %p77 = scmp.eq.s32.totalorder %s13, 1
      %p78 = scmp.ne.s32.totalorder %s73, %s75
      %p79 = scmp.eq.s32.totalorder %s13, 0
      %p80 = por %p78, %p79
      %p81 = scmp.ne.s32.totalorder %s73, %s75
      %p82 = scmp.eq.s32.totalorder %s18, 1
      %p83 = por %p81, %p82
      %p84 = scmp.ne.s32.totalorder %s75, %s76
      %p85 = scmp.eq.s32.totalorder %s18, 0
      %p86 = por %p84, %p85
      %p87 = scmp.ne.s32.totalorder %s75, %s76
      %p88 = scmp.eq.s32.totalorder %s19, 1
      %p89 = por %p87, %p88
      %p91 = scmp.ne.s32.totalorder %s76, %s90
      %p92 = scmp.eq.s32.totalorder %s19, 0
      %p93 = por %p91, %p92
      %s95 = sadd.s32 %s94, 1
      %p98 = scmp.eq.s32.totalorder %s13, 1
      %p99 = scmp.ne.s32.totalorder %s94, %s96
      %p100 = scmp.eq.s32.totalorder %s13, 0
      %p101 = por %p99, %p100
      %p102 = scmp.ne.s32.totalorder %s94, %s96
      %p103 = scmp.eq.s32.totalorder %s18, 1
      %p104 = por %p102, %p103
      %p105 = scmp.ne.s32.totalorder %s96, %s97
      %p106 = scmp.eq.s32.totalorder %s18, 0
      %p107 = por %p105, %p106
      %p108 = scmp.ne.s32.totalorder %s96, %s97
      %p109 = scmp.eq.s32.totalorder %s19, 1
      %p110 = por %p108, %p109
      %p112 = scmp.ne.s32.totalorder %s97, %s111
      %p113 = scmp.eq.s32.totalorder %s19, 0
      %p114 = por %p112, %p113
      %s115 = ssub.s32 %s13, %s20
      %p116 = scmp.eq.s32.totalorder %s115, 0
      %s118 = sadd.s32 %s117, 1
      %s119 = scalar_select %p116, %s117, %s118
      %p122 = pneg %p116
      %p123 = scmp.eq.s32.totalorder %s13, 1
      %p124 = por %p122, %p123
      %p125 = scmp.ne.s32.totalorder %s117, %s120
      %p126 = scmp.eq.s32.totalorder %s13, 0
      %p127 = por %p125, %p126
      %p128 = scmp.ne.s32.totalorder %s117, %s120
      %p129 = scmp.eq.s32.totalorder %s18, 1
      %p130 = por %p128, %p129
      %p131 = scmp.ne.s32.totalorder %s120, %s121
      %p132 = scmp.eq.s32.totalorder %s18, 0
      %p133 = por %p131, %p132
      %p134 = scmp.ne.s32.totalorder %s120, %s121
      %p135 = scmp.eq.s32.totalorder %s19, 1
      %p136 = por %p134, %p135
      %p138 = scmp.ne.s32.totalorder %s121, %s137
      %p139 = scmp.eq.s32.totalorder %s19, 0
      %p140 = por %p138, %p139
      %p141 = scmp.le.s32.totalorder 1, %s13
      %p142 = scmp.lt.s32.totalorder %s13, 3
      %p143 = pnand %p141, %p142
      %p144 = pneg %p143
      // Predicated region
      $region9: #{tpu_custom_call.1} parent=5 // pred_check
        _
      $region10: #{tpu_custom_call.1} parent=5 // pred_check_branch
        %146 = sbr.rel (%p143) target = $region12
      $region11: #{tpu_custom_call.1} parent=5 // pred_region
        %s147 = ssub.s32 %s13, 1
        // Predicated region
        $region13: #{tpu_custom_call.1} parent=11 // pred_check
          %p148 = pneg %p86
        $region14: #{tpu_custom_call.1} parent=11 // pred_check_branch
          %150 = sbr.rel (%p148) target = $region16
        $region15: #{tpu_custom_call.1} parent=11 // pred_region
          _
        $region16: #{tpu_custom_call.1} parent=11 // pred_fallthru
          _
        // Predicated region
        $region17: #{tpu_custom_call.1} parent=11 // pred_check
          %p151 = pneg %p107
        $region18: #{tpu_custom_call.1} parent=11 // pred_check_branch
          %153 = sbr.rel (%p151) target = $region20
        $region19: #{tpu_custom_call.1} parent=11 // pred_region
          _
        $region20: #{tpu_custom_call.1} parent=11 // pred_fallthru
          _
      $region12: #{tpu_custom_call.1} parent=5 // pred_fallthru
        _
      %p154 = scmp.lt.s32.totalorder %s13, 2
      // Predicated region
      $region21: #{tpu_custom_call.1} parent=5 // pred_check
        %p155 = pneg %p154
      $region22: #{tpu_custom_call.1} parent=5 // pred_check_branch
        %157 = sbr.rel (%p155) target = $region24
      $region23: #{tpu_custom_call.1} parent=5 // pred_region
        // Predicated region
        $region25: #{tpu_custom_call.1} parent=23 // pred_check
          %p158 = pneg %p33
        $region26: #{tpu_custom_call.1} parent=23 // pred_check_branch
          %160 = sbr.rel (%p158) target = $region28
        $region27: #{tpu_custom_call.1} parent=23 // pred_region
          %s161 = sand.u32 %s23, 1
          %s162 = sand.u32 %s23, 1
          %s163 = smul.addr %s162, 32
          %s164 = scalar_lea.vmem [#allocation2], %s163
          %s165 = smul.addr %s13, 8
          %s166 = scalar_lea.vmem %s0, %s165
          // Predicated region
          $region29: #{tpu_custom_call.1} parent=27 // pred_check
            _
          $region30: #{tpu_custom_call.1} parent=27 // pred_check_branch
            %168 = sbr.rel (0) target = $region32
          $region31: #{tpu_custom_call.1} parent=27 // pred_region
            // Predicated region
            $region33: #{tpu_custom_call.1} parent=31 // pred_check
              _
            $region34: #{tpu_custom_call.1} parent=31 // pred_check_branch
              %170 = sbr.rel (0) target = $region36
            $region35: #{tpu_custom_call.1} parent=31 // pred_region
              // Predicated region
              $region48: #{tpu_custom_call.1} parent=35 // pred_check
                _
              $region49: #{tpu_custom_call.1} parent=35 // pred_check_branch
                %192 = sbr.rel (0) target = $region51
              $region50: #{tpu_custom_call.1} parent=35 // pred_region
                loop: start=0, step=1, limit=1
                $region52: #{tpu_custom_call.1} parent=50 // loop_pre_header
                  _
                $region53: #{tpu_custom_call.1} parent=50 // loop_header
                  %s194 = sphi 0, %s198
                  %p195 = scmp.ge.s32.totalorder %s194, 1
                  %s199 = sphi %s166, %s166
                  %s200 = sphi %s164, %s164
                $region54: #{tpu_custom_call.1} parent=50 // loop_header_branch
                  %197 = sbr.rel (%p195) target = $region58
                $region55: #{tpu_custom_call.1} parent=50 // loop_body
                  %v201 = vld [vmem:[%s199] sm:$0xff]
                  %202 = vst [vmem:[%s200] sm:$0xff] %v201
                  %v203 = vld [vmem:[%s199 + $0x10] sm:$0xff]
                  %204 = vst [vmem:[%s200 + $0x8] sm:$0xff] %v203
                  %v205 = vld [vmem:[%s199 + $0x20] sm:$0xff]
                  %206 = vst [vmem:[%s200 + $0x10] sm:$0xff] %v205
                  %v207 = vld [vmem:[%s199 + $0x30] sm:$0xff]
                  %208 = vst [vmem:[%s200 + $0x18] sm:$0xff] %v207
                $region56: #{tpu_custom_call.1} parent=50 // loop_footer
                  %s198 = sadd.s32 1, %s194
                $region57: #{tpu_custom_call.1} parent=50 // loop_footer_branch
                  %193 = sbr.rel target = $region53
                $region58: #{tpu_custom_call.1} parent=50 // loop_exit
                  _
              $region51: #{tpu_custom_call.1} parent=35 // pred_fallthru
                _
              // Predicated region
              $region59: #{tpu_custom_call.1} parent=35 // pred_check
                _
              $region60: #{tpu_custom_call.1} parent=35 // pred_check_branch
                %210 = sbr.rel target = $region62
              $region61: #{tpu_custom_call.1} parent=35 // pred_region
                _
              $region62: #{tpu_custom_call.1} parent=35 // pred_fallthru
                _
            $region36: #{tpu_custom_call.1} parent=31 // pred_fallthru
              _
            // Predicated region
            $region37: #{tpu_custom_call.1} parent=31 // pred_check
              _
            $region38: #{tpu_custom_call.1} parent=31 // pred_check_branch
              %172 = sbr.rel target = $region40
            $region39: #{tpu_custom_call.1} parent=31 // pred_region
              %s174 = ssub.s32 256, 1
              loop: start=0, step=1, limit=1
              $region41: #{tpu_custom_call.1} parent=39 // loop_pre_header
                _
              $region42: #{tpu_custom_call.1} parent=39 // loop_header
                %s176 = sphi 0, %s180
                %p177 = scmp.ge.s32.totalorder %s176, 1
                %s181 = sphi %s166, %s166
                %s182 = sphi %s164, %s164
              $region43: #{tpu_custom_call.1} parent=39 // loop_header_branch
                %179 = sbr.rel (%p177) target = $region47
              $region44: #{tpu_custom_call.1} parent=39 // loop_body
                %v183 = vld [vmem:[%s181] sm:%s174]
                %184 = vst [vmem:[%s182] sm:%s174] %v183
                %v185 = vld [vmem:[%s181 + $0x10] sm:%s174]
                %186 = vst [vmem:[%s182 + $0x8] sm:%s174] %v185
                %v187 = vld [vmem:[%s181 + $0x20] sm:%s174]
                %188 = vst [vmem:[%s182 + $0x10] sm:%s174] %v187
                %v189 = vld [vmem:[%s181 + $0x30] sm:%s174]
                %190 = vst [vmem:[%s182 + $0x18] sm:%s174] %v189
              $region45: #{tpu_custom_call.1} parent=39 // loop_footer
                %s180 = sadd.s32 1, %s176
              $region46: #{tpu_custom_call.1} parent=39 // loop_footer_branch
                %175 = sbr.rel target = $region42
              $region47: #{tpu_custom_call.1} parent=39 // loop_exit
                _
            $region40: #{tpu_custom_call.1} parent=31 // pred_fallthru
              _
          $region32: #{tpu_custom_call.1} parent=27 // pred_fallthru
            _
          %211 = vnop
        $region28: #{tpu_custom_call.1} parent=23 // pred_fallthru
          _
        // Predicated region
        $region63: #{tpu_custom_call.1} parent=23 // pred_check
          %p212 = pneg %p59
        $region64: #{tpu_custom_call.1} parent=23 // pred_check_branch
          %214 = sbr.rel (%p212) target = $region66
        $region65: #{tpu_custom_call.1} parent=23 // pred_region
          %s215 = sand.u32 %s49, 1
          %s216 = sand.u32 %s49, 1
          %s217 = smul.addr %s216, 32
          %s218 = scalar_lea.vmem [#allocation3], %s217
          %s219 = smul.addr %s13, 8
          %s220 = scalar_lea.vmem %s1, %s219
          // Predicated region
          $region67: #{tpu_custom_call.1} parent=65 // pred_check
            _
          $region68: #{tpu_custom_call.1} parent=65 // pred_check_branch
            %222 = sbr.rel (0) target = $region70
          $region69: #{tpu_custom_call.1} parent=65 // pred_region
            // Predicated region
            $region71: #{tpu_custom_call.1} parent=69 // pred_check
              _
            $region72: #{tpu_custom_call.1} parent=69 // pred_check_branch
              %224 = sbr.rel (0) target = $region74
            $region73: #{tpu_custom_call.1} parent=69 // pred_region
              // Predicated region
              $region86: #{tpu_custom_call.1} parent=73 // pred_check
                _
              $region87: #{tpu_custom_call.1} parent=73 // pred_check_branch
                %246 = sbr.rel (0) target = $region89
              $region88: #{tpu_custom_call.1} parent=73 // pred_region
                loop: start=0, step=1, limit=1
                $region90: #{tpu_custom_call.1} parent=88 // loop_pre_header
                  _
                $region91: #{tpu_custom_call.1} parent=88 // loop_header
                  %s248 = sphi 0, %s252
                  %p249 = scmp.ge.s32.totalorder %s248, 1
                  %s253 = sphi %s220, %s220
                  %s254 = sphi %s218, %s218
                $region92: #{tpu_custom_call.1} parent=88 // loop_header_branch
                  %251 = sbr.rel (%p249) target = $region96
                $region93: #{tpu_custom_call.1} parent=88 // loop_body
                  %v255 = vld [vmem:[%s253] sm:$0xff]
                  %256 = vst [vmem:[%s254] sm:$0xff] %v255
                  %v257 = vld [vmem:[%s253 + $0x10] sm:$0xff]
                  %258 = vst [vmem:[%s254 + $0x8] sm:$0xff] %v257
                  %v259 = vld [vmem:[%s253 + $0x20] sm:$0xff]
                  %260 = vst [vmem:[%s254 + $0x10] sm:$0xff] %v259
                  %v261 = vld [vmem:[%s253 + $0x30] sm:$0xff]
                  %262 = vst [vmem:[%s254 + $0x18] sm:$0xff] %v261
                $region94: #{tpu_custom_call.1} parent=88 // loop_footer
                  %s252 = sadd.s32 1, %s248
                $region95: #{tpu_custom_call.1} parent=88 // loop_footer_branch
                  %247 = sbr.rel target = $region91
                $region96: #{tpu_custom_call.1} parent=88 // loop_exit
                  _
              $region89: #{tpu_custom_call.1} parent=73 // pred_fallthru
                _
              // Predicated region
              $region97: #{tpu_custom_call.1} parent=73 // pred_check
                _
              $region98: #{tpu_custom_call.1} parent=73 // pred_check_branch
                %264 = sbr.rel target = $region100
              $region99: #{tpu_custom_call.1} parent=73 // pred_region
                _
              $region100: #{tpu_custom_call.1} parent=73 // pred_fallthru
                _
            $region74: #{tpu_custom_call.1} parent=69 // pred_fallthru
              _
            // Predicated region
            $region75: #{tpu_custom_call.1} parent=69 // pred_check
              _
            $region76: #{tpu_custom_call.1} parent=69 // pred_check_branch
              %226 = sbr.rel target = $region78
            $region77: #{tpu_custom_call.1} parent=69 // pred_region
              %s228 = ssub.s32 256, 1
              loop: start=0, step=1, limit=1
              $region79: #{tpu_custom_call.1} parent=77 // loop_pre_header
                _
              $region80: #{tpu_custom_call.1} parent=77 // loop_header
                %s230 = sphi 0, %s234
                %p231 = scmp.ge.s32.totalorder %s230, 1
                %s235 = sphi %s220, %s220
                %s236 = sphi %s218, %s218
              $region81: #{tpu_custom_call.1} parent=77 // loop_header_branch
                %233 = sbr.rel (%p231) target = $region85
              $region82: #{tpu_custom_call.1} parent=77 // loop_body
                %v237 = vld [vmem:[%s235] sm:%s228]
                %238 = vst [vmem:[%s236] sm:%s228] %v237
                %v239 = vld [vmem:[%s235 + $0x10] sm:%s228]
                %240 = vst [vmem:[%s236 + $0x8] sm:%s228] %v239
                %v241 = vld [vmem:[%s235 + $0x20] sm:%s228]
                %242 = vst [vmem:[%s236 + $0x10] sm:%s228] %v241
                %v243 = vld [vmem:[%s235 + $0x30] sm:%s228]
                %244 = vst [vmem:[%s236 + $0x18] sm:%s228] %v243
              $region83: #{tpu_custom_call.1} parent=77 // loop_footer
                %s234 = sadd.s32 1, %s230
              $region84: #{tpu_custom_call.1} parent=77 // loop_footer_branch
                %229 = sbr.rel target = $region80
              $region85: #{tpu_custom_call.1} parent=77 // loop_exit
                _
            $region78: #{tpu_custom_call.1} parent=69 // pred_fallthru
              _
          $region70: #{tpu_custom_call.1} parent=65 // pred_fallthru
            _
          %265 = vnop
        $region66: #{tpu_custom_call.1} parent=23 // pred_fallthru
          _
      $region24: #{tpu_custom_call.1} parent=5 // pred_fallthru
        _
      %p266 = scmp.le.s32.totalorder 1, %s13
      %p267 = scmp.lt.s32.totalorder %s13, 3
      %p268 = pnand %p266, %p267
      %p269 = pneg %p268
      // Predicated region
      $region101: #{tpu_custom_call.1} parent=5 // pred_check
        _
      $region102: #{tpu_custom_call.1} parent=5 // pred_check_branch
        %271 = sbr.rel (%p268) target = $region104
      $region103: #{tpu_custom_call.1} parent=5 // pred_region
        %s272 = ssub.s32 %s13, 1
        %s273 = sand.u32 %s26, 1
        %s274 = sand.u32 %s26, 1
        %s275 = smul.addr %s274, 32
        %s276 = scalar_lea.vmem [#allocation2], %s275
        // Predicated region
        $region105: #{tpu_custom_call.1} parent=103 // pred_check
          %p277 = pneg %p39
        $region106: #{tpu_custom_call.1} parent=103 // pred_check_branch
          %279 = sbr.rel (%p277) target = $region108
        $region107: #{tpu_custom_call.1} parent=103 // pred_region
          _
        $region108: #{tpu_custom_call.1} parent=103 // pred_fallthru
          _
        %s280 = sand.u32 %s52, 1
        %s281 = sand.u32 %s52, 1
        %s282 = smul.addr %s281, 32
        %s283 = scalar_lea.vmem [#allocation3], %s282
        // Predicated region
        $region109: #{tpu_custom_call.1} parent=103 // pred_check
          %p284 = pneg %p65
        $region110: #{tpu_custom_call.1} parent=103 // pred_check_branch
          %286 = sbr.rel (%p284) target = $region112
        $region111: #{tpu_custom_call.1} parent=103 // pred_region
          _
        $region112: #{tpu_custom_call.1} parent=103 // pred_fallthru
          _
        %s287 = sand.u32 %s26, 1
        %s288 = sand.u32 %s26, 1
        %s289 = smul.addr %s288, 32
        %s290 = scalar_lea.vmem [#allocation2], %s289
        %p291 = pneg %p39
        %p292 = pneg %p36
        %s293 = sand.u32 %s52, 1
        %s294 = sand.u32 %s52, 1
        %s295 = smul.addr %s294, 32
        %s296 = scalar_lea.vmem [#allocation3], %s295
        %p297 = pneg %p65
        %p298 = pneg %p62
        %p299 = pneg %p86
        %p300 = pneg %p83
        %p301 = pneg %p107
        %p302 = pneg %p104
        %p303 = pneg %p133
        %p304 = pneg %p130
        %s305 = sand.u32 %s120, 1
        %s306 = scalar_lea.sflag [#allocation5], %s305
        %s307 = sand.u32 %s120, 1
        %s308 = smul.addr %s307, 8
        %s309 = scalar_lea.vmem [#allocation4], %s308
        %v310 = vld [vmem:[%s276] sm:$0xff]
        %v311 = vld [vmem:[%s276 + $0x8] sm:$0xff]
        %v312 = vld [vmem:[%s276 + $0x10] sm:$0xff]
        %v313 = vld [vmem:[%s276 + $0x18] sm:$0xff]
        %v314 = vld [vmem:[%s2] sm:$0xff]
        %v315 = vld [vmem:[%s2 + $0x8] sm:$0xff]
        %v316 = vld [vmem:[%s2 + $0x10] sm:$0xff]
        %v317 = vld [vmem:[%s2 + $0x18] sm:$0xff]
        %v318 = vld [vmem:[%s2 + $0x20] sm:$0xff]
        %v319 = vld [vmem:[%s2 + $0x28] sm:$0xff]
        %v320 = vld [vmem:[%s2 + $0x30] sm:$0xff]
        %v321 = vld [vmem:[%s2 + $0x38] sm:$0xff]
        %v322 = vld [vmem:[%s3] sm:$0x1]
        %v323 = vld [vmem:[%s3 + $0x1] sm:$0x1]
        %v324 = vld [vmem:[%s3 + $0x2] sm:$0x1]
        %v325 = vld [vmem:[%s3 + $0x3] sm:$0x1]
        %v330 = vperm.slane %v322, 0
        %v331 = vperm.slane %v323, 0
        %v332 = vperm.slane %v324, 0
        %v333 = vperm.slane %v325, 0
        %vm338 = vcmask 64512
        %v340 = vsel %vm338, %v310, 0
        %v343 = vsel %vm338, %v314, 0
        %v346 = vsel %vm338, %v315, 0
        %348 = vmatpush.xpose.msra.mxu0 0.0
        %349 = vmatpush.xpose.msra.mxu0 0.0
        %350 = vmatpush.xpose.msra.mxu0 0.0
        %351 = vmatpush.xpose.msra.mxu0 0.0
        %352 = vmatpush.xpose.msra.mxu0 0.0
        %353 = vmatpush.xpose.msra.mxu0 0.0
        %354 = vmatpush.xpose.msra.mxu0 0.0
        %355 = vmatpush.xpose.msra.mxu0 0.0
        %356 = vmatpush.xpose.msra.mxu0 0.0
        %357 = vmatpush.xpose.msra.mxu0 0.0
        %358 = vmatpush.xpose.msra.mxu0 0.0
        %359 = vmatpush.xpose.msra.mxu0 0.0
        %360 = vmatpush.xpose.msra.mxu0 0.0
        %361 = vmatpush.xpose.msra.mxu0 0.0
        %v362 = vand.u32 %v346, 4294901760
        %363 = vmatpush.xpose.msra.mxu0 %v362
        %v364 = vand.u32 %v343, 4294901760
        %365 = vmatpush.xpose.msra.mxu0 %v364
        %v366 = vand.u32 %v340, 4294901760
        %v367 = vsub.f32 %v340, %v366
        %v368 = vand.u32 %v367, 4294901760
        %v369 = vsub.f32 %v367, %v368
        %v370 = vand.u32 %v369, 4294901760
        %371 = vmatmul.f32.gmra.mxu0 %v370
        %v372 = vpop.f32.mrf.mxu0
        %v373 = vadd.f32 %v330, %v372
        %374 = vdwg.mxu0
        %375 = vmatpush.xpose.msra.mxu0 0.0
        %376 = vmatpush.xpose.msra.mxu0 0.0
        %377 = vmatpush.xpose.msra.mxu0 0.0
        %378 = vmatpush.xpose.msra.mxu0 0.0
        %379 = vmatpush.xpose.msra.mxu0 0.0
        %380 = vmatpush.xpose.msra.mxu0 0.0
        %381 = vmatpush.xpose.msra.mxu0 0.0
        %382 = vmatpush.xpose.msra.mxu0 0.0
        %383 = vmatpush.xpose.msra.mxu0 0.0
        %384 = vmatpush.xpose.msra.mxu0 0.0
        %385 = vmatpush.xpose.msra.mxu0 0.0
        %386 = vmatpush.xpose.msra.mxu0 0.0
        %387 = vmatpush.xpose.msra.mxu0 0.0
        %388 = vmatpush.xpose.msra.mxu0 0.0
        %v389 = vand.u32 %v346, 4294901760
        %v390 = vsub.f32 %v346, %v389
        %v391 = vand.u32 %v390, 4294901760
        %v392 = vsub.f32 %v390, %v391
        %v393 = vand.u32 %v392, 4294901760
        %394 = vmatpush.xpose.msra.mxu0 %v393
        %v395 = vand.u32 %v343, 4294901760
        %v396 = vsub.f32 %v343, %v395
        %v397 = vand.u32 %v396, 4294901760
        %v398 = vsub.f32 %v396, %v397
        %v399 = vand.u32 %v398, 4294901760
        %400 = vmatpush.xpose.msra.mxu0 %v399
        %v401 = vand.u32 %v340, 4294901760
        %402 = vmatmul.f32.gmra.mxu0 %v401
        %v403 = vpop.f32.mrf.mxu0
        %v404 = vadd.f32 %v373, %v403
        %405 = vdwg.mxu0
        %406 = vmatpush.xpose.msra.mxu0 0.0
        %407 = vmatpush.xpose.msra.mxu0 0.0
        %408 = vmatpush.xpose.msra.mxu0 0.0
        %409 = vmatpush.xpose.msra.mxu0 0.0
        %410 = vmatpush.xpose.msra.mxu0 0.0
        %411 = vmatpush.xpose.msra.mxu0 0.0
        %412 = vmatpush.xpose.msra.mxu0 0.0
        %413 = vmatpush.xpose.msra.mxu0 0.0
        %414 = vmatpush.xpose.msra.mxu0 0.0
        %415 = vmatpush.xpose.msra.mxu0 0.0
        %416 = vmatpush.xpose.msra.mxu0 0.0
        %417 = vmatpush.xpose.msra.mxu0 0.0
        %418 = vmatpush.xpose.msra.mxu0 0.0
        %419 = vmatpush.xpose.msra.mxu0 0.0
        %v420 = vand.u32 %v346, 4294901760
        %v421 = vsub.f32 %v346, %v420
        %422 = vmatpush.xpose.msra.mxu0 %v421
        %v423 = vand.u32 %v343, 4294901760
        %v424 = vsub.f32 %v343, %v423
        %425 = vmatpush.xpose.msra.mxu0 %v424
        %v426 = vand.u32 %v340, 4294901760
        %v427 = vsub.f32 %v340, %v426
        %428 = vmatmul.f32.gmra.mxu0 %v427
        %v429 = vpop.f32.mrf.mxu0
        %v430 = vadd.f32 %v404, %v429
        %431 = vdwg.mxu0
        %432 = vmatpush.xpose.msra.mxu0 0.0
        %433 = vmatpush.xpose.msra.mxu0 0.0
        %434 = vmatpush.xpose.msra.mxu0 0.0
        %435 = vmatpush.xpose.msra.mxu0 0.0
        %436 = vmatpush.xpose.msra.mxu0 0.0
        %437 = vmatpush.xpose.msra.mxu0 0.0
        %438 = vmatpush.xpose.msra.mxu0 0.0
        %439 = vmatpush.xpose.msra.mxu0 0.0
        %440 = vmatpush.xpose.msra.mxu0 0.0
        %441 = vmatpush.xpose.msra.mxu0 0.0
        %442 = vmatpush.xpose.msra.mxu0 0.0
        %443 = vmatpush.xpose.msra.mxu0 0.0
        %444 = vmatpush.xpose.msra.mxu0 0.0
        %445 = vmatpush.xpose.msra.mxu0 0.0
        %v446 = vand.u32 %v346, 4294901760
        %447 = vmatpush.xpose.msra.mxu0 %v446
        %v448 = vand.u32 %v343, 4294901760
        %449 = vmatpush.xpose.msra.mxu0 %v448
        %v450 = vand.u32 %v340, 4294901760
        %v451 = vsub.f32 %v340, %v450
        %v452 = vand.u32 %v451, 4294901760
        %453 = vmatmul.f32.gmra.mxu0 %v452
        %v454 = vpop.f32.mrf.mxu0
        %v455 = vadd.f32 %v430, %v454
        %456 = vdwg.mxu0
        %457 = vmatpush.xpose.msra.mxu0 0.0
        %458 = vmatpush.xpose.msra.mxu0 0.0
        %459 = vmatpush.xpose.msra.mxu0 0.0
        %460 = vmatpush.xpose.msra.mxu0 0.0
        %461 = vmatpush.xpose.msra.mxu0 0.0
        %462 = vmatpush.xpose.msra.mxu0 0.0
        %463 = vmatpush.xpose.msra.mxu0 0.0
        %464 = vmatpush.xpose.msra.mxu0 0.0
        %465 = vmatpush.xpose.msra.mxu0 0.0
        %466 = vmatpush.xpose.msra.mxu0 0.0
        %467 = vmatpush.xpose.msra.mxu0 0.0
        %468 = vmatpush.xpose.msra.mxu0 0.0
        %469 = vmatpush.xpose.msra.mxu0 0.0
        %470 = vmatpush.xpose.msra.mxu0 0.0
        %v471 = vand.u32 %v346, 4294901760
        %v472 = vsub.f32 %v346, %v471
        %v473 = vand.u32 %v472, 4294901760
        %474 = vmatpush.xpose.msra.mxu0 %v473
        %v475 = vand.u32 %v343, 4294901760
        %v476 = vsub.f32 %v343, %v475
        %v477 = vand.u32 %v476, 4294901760
        %478 = vmatpush.xpose.msra.mxu0 %v477
        %v479 = vand.u32 %v340, 4294901760
        %480 = vmatmul.f32.gmra.mxu0 %v479
        %v481 = vpop.f32.mrf.mxu0
        %v482 = vadd.f32 %v455, %v481
        %483 = vdwg.mxu0
        %484 = vmatpush.xpose.msra.mxu0 0.0
        %485 = vmatpush.xpose.msra.mxu0 0.0
        %486 = vmatpush.xpose.msra.mxu0 0.0
        %487 = vmatpush.xpose.msra.mxu0 0.0
        %488 = vmatpush.xpose.msra.mxu0 0.0
        %489 = vmatpush.xpose.msra.mxu0 0.0
        %490 = vmatpush.xpose.msra.mxu0 0.0
        %491 = vmatpush.xpose.msra.mxu0 0.0
        %492 = vmatpush.xpose.msra.mxu0 0.0
        %493 = vmatpush.xpose.msra.mxu0 0.0
        %494 = vmatpush.xpose.msra.mxu0 0.0
        %495 = vmatpush.xpose.msra.mxu0 0.0
        %496 = vmatpush.xpose.msra.mxu0 0.0
        %497 = vmatpush.xpose.msra.mxu0 0.0
        %v498 = vand.u32 %v346, 4294901760
        %499 = vmatpush.xpose.msra.mxu0 %v498
        %v500 = vand.u32 %v343, 4294901760
        %501 = vmatpush.xpose.msra.mxu0 %v500
        %v502 = vand.u32 %v340, 4294901760
        %503 = vmatmul.f32.gmra.mxu0 %v502
        %v504 = vpop.f32.mrf.mxu0
        %v505 = vadd.f32 %v482, %v504
        %506 = vdwg.mxu0
        %v508 = vsel %vm338, %v311, 0
        %v511 = vsel %vm338, %v316, 0
        %v514 = vsel %vm338, %v317, 0
        %516 = vmatpush.xpose.msra.mxu0 0.0
        %517 = vmatpush.xpose.msra.mxu0 0.0
        %518 = vmatpush.xpose.msra.mxu0 0.0
        %519 = vmatpush.xpose.msra.mxu0 0.0
        %520 = vmatpush.xpose.msra.mxu0 0.0
        %521 = vmatpush.xpose.msra.mxu0 0.0
        %522 = vmatpush.xpose.msra.mxu0 0.0
        %523 = vmatpush.xpose.msra.mxu0 0.0
        %524 = vmatpush.xpose.msra.mxu0 0.0
        %525 = vmatpush.xpose.msra.mxu0 0.0
        %526 = vmatpush.xpose.msra.mxu0 0.0
        %527 = vmatpush.xpose.msra.mxu0 0.0
        %528 = vmatpush.xpose.msra.mxu0 0.0
        %529 = vmatpush.xpose.msra.mxu0 0.0
        %v530 = vand.u32 %v514, 4294901760
        %531 = vmatpush.xpose.msra.mxu0 %v530
        %v532 = vand.u32 %v511, 4294901760
        %533 = vmatpush.xpose.msra.mxu0 %v532
        %v534 = vand.u32 %v508, 4294901760
        %v535 = vsub.f32 %v508, %v534
        %v536 = vand.u32 %v535, 4294901760
        %v537 = vsub.f32 %v535, %v536
        %v538 = vand.u32 %v537, 4294901760
        %539 = vmatmul.f32.gmra.mxu0 %v538
        %v540 = vpop.f32.mrf.mxu0
        %v541 = vadd.f32 %v331, %v540
        %542 = vdwg.mxu0
        %543 = vmatpush.xpose.msra.mxu0 0.0
        %544 = vmatpush.xpose.msra.mxu0 0.0
        %545 = vmatpush.xpose.msra.mxu0 0.0
        %546 = vmatpush.xpose.msra.mxu0 0.0
        %547 = vmatpush.xpose.msra.mxu0 0.0
        %548 = vmatpush.xpose.msra.mxu0 0.0
        %549 = vmatpush.xpose.msra.mxu0 0.0
        %550 = vmatpush.xpose.msra.mxu0 0.0
        %551 = vmatpush.xpose.msra.mxu0 0.0
        %552 = vmatpush.xpose.msra.mxu0 0.0
        %553 = vmatpush.xpose.msra.mxu0 0.0
        %554 = vmatpush.xpose.msra.mxu0 0.0
        %555 = vmatpush.xpose.msra.mxu0 0.0
        %556 = vmatpush.xpose.msra.mxu0 0.0
        %v557 = vand.u32 %v514, 4294901760
        %v558 = vsub.f32 %v514, %v557
        %v559 = vand.u32 %v558, 4294901760
        %v560 = vsub.f32 %v558, %v559
        %v561 = vand.u32 %v560, 4294901760
        %562 = vmatpush.xpose.msra.mxu0 %v561
        %v563 = vand.u32 %v511, 4294901760
        %v564 = vsub.f32 %v511, %v563
        %v565 = vand.u32 %v564, 4294901760
        %v566 = vsub.f32 %v564, %v565
        %v567 = vand.u32 %v566, 4294901760
        %568 = vmatpush.xpose.msra.mxu0 %v567
        %v569 = vand.u32 %v508, 4294901760
        %570 = vmatmul.f32.gmra.mxu0 %v569
        %v571 = vpop.f32.mrf.mxu0
        %v572 = vadd.f32 %v541, %v571
        %573 = vdwg.mxu0
        %574 = vmatpush.xpose.msra.mxu0 0.0
        %575 = vmatpush.xpose.msra.mxu0 0.0
        %576 = vmatpush.xpose.msra.mxu0 0.0
        %577 = vmatpush.xpose.msra.mxu0 0.0
        %578 = vmatpush.xpose.msra.mxu0 0.0
        %579 = vmatpush.xpose.msra.mxu0 0.0
        %580 = vmatpush.xpose.msra.mxu0 0.0
        %581 = vmatpush.xpose.msra.mxu0 0.0
        %582 = vmatpush.xpose.msra.mxu0 0.0
        %583 = vmatpush.xpose.msra.mxu0 0.0
        %584 = vmatpush.xpose.msra.mxu0 0.0
        %585 = vmatpush.xpose.msra.mxu0 0.0
        %586 = vmatpush.xpose.msra.mxu0 0.0
        %587 = vmatpush.xpose.msra.mxu0 0.0
        %v588 = vand.u32 %v514, 4294901760
        %v589 = vsub.f32 %v514, %v588
        %590 = vmatpush.xpose.msra.mxu0 %v589
        %v591 = vand.u32 %v511, 4294901760
        %v592 = vsub.f32 %v511, %v591
        %593 = vmatpush.xpose.msra.mxu0 %v592
        %v594 = vand.u32 %v508, 4294901760
        %v595 = vsub.f32 %v508, %v594
        %596 = vmatmul.f32.gmra.mxu0 %v595
        %v597 = vpop.f32.mrf.mxu0
        %v598 = vadd.f32 %v572, %v597
        %599 = vdwg.mxu0
        %600 = vmatpush.xpose.msra.mxu0 0.0
        %601 = vmatpush.xpose.msra.mxu0 0.0
        %602 = vmatpush.xpose.msra.mxu0 0.0
        %603 = vmatpush.xpose.msra.mxu0 0.0
        %604 = vmatpush.xpose.msra.mxu0 0.0
        %605 = vmatpush.xpose.msra.mxu0 0.0
        %606 = vmatpush.xpose.msra.mxu0 0.0
        %607 = vmatpush.xpose.msra.mxu0 0.0
        %608 = vmatpush.xpose.msra.mxu0 0.0
        %609 = vmatpush.xpose.msra.mxu0 0.0
        %610 = vmatpush.xpose.msra.mxu0 0.0
        %611 = vmatpush.xpose.msra.mxu0 0.0
        %612 = vmatpush.xpose.msra.mxu0 0.0
        %613 = vmatpush.xpose.msra.mxu0 0.0
        %v614 = vand.u32 %v514, 4294901760
        %615 = vmatpush.xpose.msra.mxu0 %v614
        %v616 = vand.u32 %v511, 4294901760
        %617 = vmatpush.xpose.msra.mxu0 %v616
        %v618 = vand.u32 %v508, 4294901760
        %v619 = vsub.f32 %v508, %v618
        %v620 = vand.u32 %v619, 4294901760
        %621 = vmatmul.f32.gmra.mxu0 %v620
        %v622 = vpop.f32.mrf.mxu0
        %v623 = vadd.f32 %v598, %v622
        %624 = vdwg.mxu0
        %625 = vmatpush.xpose.msra.mxu0 0.0
        %626 = vmatpush.xpose.msra.mxu0 0.0
        %627 = vmatpush.xpose.msra.mxu0 0.0
        %628 = vmatpush.xpose.msra.mxu0 0.0
        %629 = vmatpush.xpose.msra.mxu0 0.0
        %630 = vmatpush.xpose.msra.mxu0 0.0
        %631 = vmatpush.xpose.msra.mxu0 0.0
        %632 = vmatpush.xpose.msra.mxu0 0.0
        %633 = vmatpush.xpose.msra.mxu0 0.0
        %634 = vmatpush.xpose.msra.mxu0 0.0
        %635 = vmatpush.xpose.msra.mxu0 0.0
        %636 = vmatpush.xpose.msra.mxu0 0.0
        %637 = vmatpush.xpose.msra.mxu0 0.0
        %638 = vmatpush.xpose.msra.mxu0 0.0
        %v639 = vand.u32 %v514, 4294901760
        %v640 = vsub.f32 %v514, %v639
        %v641 = vand.u32 %v640, 4294901760
        %642 = vmatpush.xpose.msra.mxu0 %v641
        %v643 = vand.u32 %v511, 4294901760
        %v644 = vsub.f32 %v511, %v643
        %v645 = vand.u32 %v644, 4294901760
        %646 = vmatpush.xpose.msra.mxu0 %v645
        %v647 = vand.u32 %v508, 4294901760
        %648 = vmatmul.f32.gmra.mxu0 %v647
        %v649 = vpop.f32.mrf.mxu0
        %v650 = vadd.f32 %v623, %v649
        %651 = vdwg.mxu0
        %652 = vmatpush.xpose.msra.mxu0 0.0
        %653 = vmatpush.xpose.msra.mxu0 0.0
        %654 = vmatpush.xpose.msra.mxu0 0.0
        %655 = vmatpush.xpose.msra.mxu0 0.0
        %656 = vmatpush.xpose.msra.mxu0 0.0
        %657 = vmatpush.xpose.msra.mxu0 0.0
        %658 = vmatpush.xpose.msra.mxu0 0.0
        %659 = vmatpush.xpose.msra.mxu0 0.0
        %660 = vmatpush.xpose.msra.mxu0 0.0
        %661 = vmatpush.xpose.msra.mxu0 0.0
        %662 = vmatpush.xpose.msra.mxu0 0.0
        %663 = vmatpush.xpose.msra.mxu0 0.0
        %664 = vmatpush.xpose.msra.mxu0 0.0
        %665 = vmatpush.xpose.msra.mxu0 0.0
        %v666 = vand.u32 %v514, 4294901760
        %667 = vmatpush.xpose.msra.mxu0 %v666
        %v668 = vand.u32 %v511, 4294901760
        %669 = vmatpush.xpose.msra.mxu0 %v668
        %v670 = vand.u32 %v508, 4294901760
        %671 = vmatmul.f32.gmra.mxu0 %v670
        %v672 = vpop.f32.mrf.mxu0
        %v673 = vadd.f32 %v650, %v672
        %674 = vdwg.mxu0
        %v676 = vsel %vm338, %v312, 0
        %v679 = vsel %vm338, %v318, 0
        %v682 = vsel %vm338, %v319, 0
        %684 = vmatpush.xpose.msra.mxu0 0.0
        %685 = vmatpush.xpose.msra.mxu0 0.0
        %686 = vmatpush.xpose.msra.mxu0 0.0
        %687 = vmatpush.xpose.msra.mxu0 0.0
        %688 = vmatpush.xpose.msra.mxu0 0.0
        %689 = vmatpush.xpose.msra.mxu0 0.0
        %690 = vmatpush.xpose.msra.mxu0 0.0
        %691 = vmatpush.xpose.msra.mxu0 0.0
        %692 = vmatpush.xpose.msra.mxu0 0.0
        %693 = vmatpush.xpose.msra.mxu0 0.0
        %694 = vmatpush.xpose.msra.mxu0 0.0
        %695 = vmatpush.xpose.msra.mxu0 0.0
        %696 = vmatpush.xpose.msra.mxu0 0.0
        %697 = vmatpush.xpose.msra.mxu0 0.0
        %v698 = vand.u32 %v682, 4294901760
        %699 = vmatpush.xpose.msra.mxu0 %v698
        %v700 = vand.u32 %v679, 4294901760
        %701 = vmatpush.xpose.msra.mxu0 %v700
        %v702 = vand.u32 %v676, 4294901760
        %v703 = vsub.f32 %v676, %v702
        %v704 = vand.u32 %v703, 4294901760
        %v705 = vsub.f32 %v703, %v704
        %v706 = vand.u32 %v705, 4294901760
        %707 = vmatmul.f32.gmra.mxu0 %v706
        %v708 = vpop.f32.mrf.mxu0
        %v709 = vadd.f32 %v332, %v708
        %710 = vdwg.mxu0
        %711 = vmatpush.xpose.msra.mxu0 0.0
        %712 = vmatpush.xpose.msra.mxu0 0.0
        %713 = vmatpush.xpose.msra.mxu0 0.0
        %714 = vmatpush.xpose.msra.mxu0 0.0
        %715 = vmatpush.xpose.msra.mxu0 0.0
        %716 = vmatpush.xpose.msra.mxu0 0.0
        %717 = vmatpush.xpose.msra.mxu0 0.0
        %718 = vmatpush.xpose.msra.mxu0 0.0
        %719 = vmatpush.xpose.msra.mxu0 0.0
        %720 = vmatpush.xpose.msra.mxu0 0.0
        %721 = vmatpush.xpose.msra.mxu0 0.0
        %722 = vmatpush.xpose.msra.mxu0 0.0
        %723 = vmatpush.xpose.msra.mxu0 0.0
        %724 = vmatpush.xpose.msra.mxu0 0.0
        %v725 = vand.u32 %v682, 4294901760
        %v726 = vsub.f32 %v682, %v725
        %v727 = vand.u32 %v726, 4294901760
        %v728 = vsub.f32 %v726, %v727
        %v729 = vand.u32 %v728, 4294901760
        %730 = vmatpush.xpose.msra.mxu0 %v729
        %v731 = vand.u32 %v679, 4294901760
        %v732 = vsub.f32 %v679, %v731
        %v733 = vand.u32 %v732, 4294901760
        %v734 = vsub.f32 %v732, %v733
        %v735 = vand.u32 %v734, 4294901760
        %736 = vmatpush.xpose.msra.mxu0 %v735
        %v737 = vand.u32 %v676, 4294901760
        %738 = vmatmul.f32.gmra.mxu0 %v737
        %v739 = vpop.f32.mrf.mxu0
        %v740 = vadd.f32 %v709, %v739
        %741 = vdwg.mxu0
        %742 = vmatpush.xpose.msra.mxu0 0.0
        %743 = vmatpush.xpose.msra.mxu0 0.0
        %744 = vmatpush.xpose.msra.mxu0 0.0
        %745 = vmatpush.xpose.msra.mxu0 0.0
        %746 = vmatpush.xpose.msra.mxu0 0.0
        %747 = vmatpush.xpose.msra.mxu0 0.0
        %748 = vmatpush.xpose.msra.mxu0 0.0
        %749 = vmatpush.xpose.msra.mxu0 0.0
        %750 = vmatpush.xpose.msra.mxu0 0.0
        %751 = vmatpush.xpose.msra.mxu0 0.0
        %752 = vmatpush.xpose.msra.mxu0 0.0
        %753 = vmatpush.xpose.msra.mxu0 0.0
        %754 = vmatpush.xpose.msra.mxu0 0.0
        %755 = vmatpush.xpose.msra.mxu0 0.0
        %v756 = vand.u32 %v682, 4294901760
        %v757 = vsub.f32 %v682, %v756
        %758 = vmatpush.xpose.msra.mxu0 %v757
        %v759 = vand.u32 %v679, 4294901760
        %v760 = vsub.f32 %v679, %v759
        %761 = vmatpush.xpose.msra.mxu0 %v760
        %v762 = vand.u32 %v676, 4294901760
        %v763 = vsub.f32 %v676, %v762
        %764 = vmatmul.f32.gmra.mxu0 %v763
        %v765 = vpop.f32.mrf.mxu0
        %v766 = vadd.f32 %v740, %v765
        %767 = vdwg.mxu0
        %768 = vmatpush.xpose.msra.mxu0 0.0
        %769 = vmatpush.xpose.msra.mxu0 0.0
        %770 = vmatpush.xpose.msra.mxu0 0.0
        %771 = vmatpush.xpose.msra.mxu0 0.0
        %772 = vmatpush.xpose.msra.mxu0 0.0
        %773 = vmatpush.xpose.msra.mxu0 0.0
        %774 = vmatpush.xpose.msra.mxu0 0.0
        %775 = vmatpush.xpose.msra.mxu0 0.0
        %776 = vmatpush.xpose.msra.mxu0 0.0
        %777 = vmatpush.xpose.msra.mxu0 0.0
        %778 = vmatpush.xpose.msra.mxu0 0.0
        %779 = vmatpush.xpose.msra.mxu0 0.0
        %780 = vmatpush.xpose.msra.mxu0 0.0
        %781 = vmatpush.xpose.msra.mxu0 0.0
        %v782 = vand.u32 %v682, 4294901760
        %783 = vmatpush.xpose.msra.mxu0 %v782
        %v784 = vand.u32 %v679, 4294901760
        %785 = vmatpush.xpose.msra.mxu0 %v784
        %v786 = vand.u32 %v676, 4294901760
        %v787 = vsub.f32 %v676, %v786
        %v788 = vand.u32 %v787, 4294901760
        %789 = vmatmul.f32.gmra.mxu0 %v788
        %v790 = vpop.f32.mrf.mxu0
        %v791 = vadd.f32 %v766, %v790
        %792 = vdwg.mxu0
        %793 = vmatpush.xpose.msra.mxu0 0.0
        %794 = vmatpush.xpose.msra.mxu0 0.0
        %795 = vmatpush.xpose.msra.mxu0 0.0
        %796 = vmatpush.xpose.msra.mxu0 0.0
        %797 = vmatpush.xpose.msra.mxu0 0.0
        %798 = vmatpush.xpose.msra.mxu0 0.0
        %799 = vmatpush.xpose.msra.mxu0 0.0
        %800 = vmatpush.xpose.msra.mxu0 0.0
        %801 = vmatpush.xpose.msra.mxu0 0.0
        %802 = vmatpush.xpose.msra.mxu0 0.0
        %803 = vmatpush.xpose.msra.mxu0 0.0
        %804 = vmatpush.xpose.msra.mxu0 0.0
        %805 = vmatpush.xpose.msra.mxu0 0.0
        %806 = vmatpush.xpose.msra.mxu0 0.0
        %v807 = vand.u32 %v682, 4294901760
        %v808 = vsub.f32 %v682, %v807
        %v809 = vand.u32 %v808, 4294901760
        %810 = vmatpush.xpose.msra.mxu0 %v809
        %v811 = vand.u32 %v679, 4294901760
        %v812 = vsub.f32 %v679, %v811
        %v813 = vand.u32 %v812, 4294901760
        %814 = vmatpush.xpose.msra.mxu0 %v813
        %v815 = vand.u32 %v676, 4294901760
        %816 = vmatmul.f32.gmra.mxu0 %v815
        %v817 = vpop.f32.mrf.mxu0
        %v818 = vadd.f32 %v791, %v817
        %819 = vdwg.mxu0
        %820 = vmatpush.xpose.msra.mxu0 0.0
        %821 = vmatpush.xpose.msra.mxu0 0.0
        %822 = vmatpush.xpose.msra.mxu0 0.0
        %823 = vmatpush.xpose.msra.mxu0 0.0
        %824 = vmatpush.xpose.msra.mxu0 0.0
        %825 = vmatpush.xpose.msra.mxu0 0.0
        %826 = vmatpush.xpose.msra.mxu0 0.0
        %827 = vmatpush.xpose.msra.mxu0 0.0
        %828 = vmatpush.xpose.msra.mxu0 0.0
        %829 = vmatpush.xpose.msra.mxu0 0.0
        %830 = vmatpush.xpose.msra.mxu0 0.0
        %831 = vmatpush.xpose.msra.mxu0 0.0
        %832 = vmatpush.xpose.msra.mxu0 0.0
        %833 = vmatpush.xpose.msra.mxu0 0.0
        %v834 = vand.u32 %v682, 4294901760
        %835 = vmatpush.xpose.msra.mxu0 %v834
        %v836 = vand.u32 %v679, 4294901760
        %837 = vmatpush.xpose.msra.mxu0 %v836
        %v838 = vand.u32 %v676, 4294901760
        %839 = vmatmul.f32.gmra.mxu0 %v838
        %v840 = vpop.f32.mrf.mxu0
        %v841 = vadd.f32 %v818, %v840
        %842 = vdwg.mxu0
        %v844 = vsel %vm338, %v313, 0
        %v847 = vsel %vm338, %v320, 0
        %v850 = vsel %vm338, %v321, 0
        %852 = vmatpush.xpose.msra.mxu0 0.0
        %853 = vmatpush.xpose.msra.mxu0 0.0
        %854 = vmatpush.xpose.msra.mxu0 0.0
        %855 = vmatpush.xpose.msra.mxu0 0.0
        %856 = vmatpush.xpose.msra.mxu0 0.0
        %857 = vmatpush.xpose.msra.mxu0 0.0
        %858 = vmatpush.xpose.msra.mxu0 0.0
        %859 = vmatpush.xpose.msra.mxu0 0.0
        %860 = vmatpush.xpose.msra.mxu0 0.0
        %861 = vmatpush.xpose.msra.mxu0 0.0
        %862 = vmatpush.xpose.msra.mxu0 0.0
        %863 = vmatpush.xpose.msra.mxu0 0.0
        %864 = vmatpush.xpose.msra.mxu0 0.0
        %865 = vmatpush.xpose.msra.mxu0 0.0
        %v866 = vand.u32 %v850, 4294901760
        %867 = vmatpush.xpose.msra.mxu0 %v866
        %v868 = vand.u32 %v847, 4294901760
        %869 = vmatpush.xpose.msra.mxu0 %v868
        %v870 = vand.u32 %v844, 4294901760
        %v871 = vsub.f32 %v844, %v870
        %v872 = vand.u32 %v871, 4294901760
        %v873 = vsub.f32 %v871, %v872
        %v874 = vand.u32 %v873, 4294901760
        %875 = vmatmul.f32.gmra.mxu0 %v874
        %v876 = vpop.f32.mrf.mxu0
        %v877 = vadd.f32 %v333, %v876
        %878 = vdwg.mxu0
        %879 = vmatpush.xpose.msra.mxu0 0.0
        %880 = vmatpush.xpose.msra.mxu0 0.0
        %881 = vmatpush.xpose.msra.mxu0 0.0
        %882 = vmatpush.xpose.msra.mxu0 0.0
        %883 = vmatpush.xpose.msra.mxu0 0.0
        %884 = vmatpush.xpose.msra.mxu0 0.0
        %885 = vmatpush.xpose.msra.mxu0 0.0
        %886 = vmatpush.xpose.msra.mxu0 0.0
        %887 = vmatpush.xpose.msra.mxu0 0.0
        %888 = vmatpush.xpose.msra.mxu0 0.0
        %889 = vmatpush.xpose.msra.mxu0 0.0
        %890 = vmatpush.xpose.msra.mxu0 0.0
        %891 = vmatpush.xpose.msra.mxu0 0.0
        %892 = vmatpush.xpose.msra.mxu0 0.0
        %v893 = vand.u32 %v850, 4294901760
        %v894 = vsub.f32 %v850, %v893
        %v895 = vand.u32 %v894, 4294901760
        %v896 = vsub.f32 %v894, %v895
        %v897 = vand.u32 %v896, 4294901760
        %898 = vmatpush.xpose.msra.mxu0 %v897
        %v899 = vand.u32 %v847, 4294901760
        %v900 = vsub.f32 %v847, %v899
        %v901 = vand.u32 %v900, 4294901760
        %v902 = vsub.f32 %v900, %v901
        %v903 = vand.u32 %v902, 4294901760
        %904 = vmatpush.xpose.msra.mxu0 %v903
        %v905 = vand.u32 %v844, 4294901760
        %906 = vmatmul.f32.gmra.mxu0 %v905
        %v907 = vpop.f32.mrf.mxu0
        %v908 = vadd.f32 %v877, %v907
        %909 = vdwg.mxu0
        %910 = vmatpush.xpose.msra.mxu0 0.0
        %911 = vmatpush.xpose.msra.mxu0 0.0
        %912 = vmatpush.xpose.msra.mxu0 0.0
        %913 = vmatpush.xpose.msra.mxu0 0.0
        %914 = vmatpush.xpose.msra.mxu0 0.0
        %915 = vmatpush.xpose.msra.mxu0 0.0
        %916 = vmatpush.xpose.msra.mxu0 0.0
        %917 = vmatpush.xpose.msra.mxu0 0.0
        %918 = vmatpush.xpose.msra.mxu0 0.0
        %919 = vmatpush.xpose.msra.mxu0 0.0
        %920 = vmatpush.xpose.msra.mxu0 0.0
        %921 = vmatpush.xpose.msra.mxu0 0.0
        %922 = vmatpush.xpose.msra.mxu0 0.0
        %923 = vmatpush.xpose.msra.mxu0 0.0
        %v924 = vand.u32 %v850, 4294901760
        %v925 = vsub.f32 %v850, %v924
        %926 = vmatpush.xpose.msra.mxu0 %v925
        %v927 = vand.u32 %v847, 4294901760
        %v928 = vsub.f32 %v847, %v927
        %929 = vmatpush.xpose.msra.mxu0 %v928
        %v930 = vand.u32 %v844, 4294901760
        %v931 = vsub.f32 %v844, %v930
        %932 = vmatmul.f32.gmra.mxu0 %v931
        %v933 = vpop.f32.mrf.mxu0
        %v934 = vadd.f32 %v908, %v933
        %935 = vdwg.mxu0
        %936 = vmatpush.xpose.msra.mxu0 0.0
        %937 = vmatpush.xpose.msra.mxu0 0.0
        %938 = vmatpush.xpose.msra.mxu0 0.0
        %939 = vmatpush.xpose.msra.mxu0 0.0
        %940 = vmatpush.xpose.msra.mxu0 0.0
        %941 = vmatpush.xpose.msra.mxu0 0.0
        %942 = vmatpush.xpose.msra.mxu0 0.0
        %943 = vmatpush.xpose.msra.mxu0 0.0
        %944 = vmatpush.xpose.msra.mxu0 0.0
        %945 = vmatpush.xpose.msra.mxu0 0.0
        %946 = vmatpush.xpose.msra.mxu0 0.0
        %947 = vmatpush.xpose.msra.mxu0 0.0
        %948 = vmatpush.xpose.msra.mxu0 0.0
        %949 = vmatpush.xpose.msra.mxu0 0.0
        %v950 = vand.u32 %v850, 4294901760
        %951 = vmatpush.xpose.msra.mxu0 %v950
        %v952 = vand.u32 %v847, 4294901760
        %953 = vmatpush.xpose.msra.mxu0 %v952
        %v954 = vand.u32 %v844, 4294901760
        %v955 = vsub.f32 %v844, %v954
        %v956 = vand.u32 %v955, 4294901760
        %957 = vmatmul.f32.gmra.mxu0 %v956
        %v958 = vpop.f32.mrf.mxu0
        %v959 = vadd.f32 %v934, %v958
        %960 = vdwg.mxu0
        %961 = vmatpush.xpose.msra.mxu0 0.0
        %962 = vmatpush.xpose.msra.mxu0 0.0
        %963 = vmatpush.xpose.msra.mxu0 0.0
        %964 = vmatpush.xpose.msra.mxu0 0.0
        %965 = vmatpush.xpose.msra.mxu0 0.0
        %966 = vmatpush.xpose.msra.mxu0 0.0
        %967 = vmatpush.xpose.msra.mxu0 0.0
        %968 = vmatpush.xpose.msra.mxu0 0.0
        %969 = vmatpush.xpose.msra.mxu0 0.0
        %970 = vmatpush.xpose.msra.mxu0 0.0
        %971 = vmatpush.xpose.msra.mxu0 0.0
        %972 = vmatpush.xpose.msra.mxu0 0.0
        %973 = vmatpush.xpose.msra.mxu0 0.0
        %974 = vmatpush.xpose.msra.mxu0 0.0
        %v975 = vand.u32 %v850, 4294901760
        %v976 = vsub.f32 %v850, %v975
        %v977 = vand.u32 %v976, 4294901760
        %978 = vmatpush.xpose.msra.mxu0 %v977
        %v979 = vand.u32 %v847, 4294901760
        %v980 = vsub.f32 %v847, %v979
        %v981 = vand.u32 %v980, 4294901760
        %982 = vmatpush.xpose.msra.mxu0 %v981
        %v983 = vand.u32 %v844, 4294901760
        %984 = vmatmul.f32.gmra.mxu0 %v983
        %v985 = vpop.f32.mrf.mxu0
        %v986 = vadd.f32 %v959, %v985
        %987 = vdwg.mxu0
        %988 = vmatpush.xpose.msra.mxu0 0.0
        %989 = vmatpush.xpose.msra.mxu0 0.0
        %990 = vmatpush.xpose.msra.mxu0 0.0
        %991 = vmatpush.xpose.msra.mxu0 0.0
        %992 = vmatpush.xpose.msra.mxu0 0.0
        %993 = vmatpush.xpose.msra.mxu0 0.0
        %994 = vmatpush.xpose.msra.mxu0 0.0
        %995 = vmatpush.xpose.msra.mxu0 0.0
        %996 = vmatpush.xpose.msra.mxu0 0.0
        %997 = vmatpush.xpose.msra.mxu0 0.0
        %998 = vmatpush.xpose.msra.mxu0 0.0
        %999 = vmatpush.xpose.msra.mxu0 0.0
        %1000 = vmatpush.xpose.msra.mxu0 0.0
        %1001 = vmatpush.xpose.msra.mxu0 0.0
        %v1002 = vand.u32 %v850, 4294901760
        %1003 = vmatpush.xpose.msra.mxu0 %v1002
        %v1004 = vand.u32 %v847, 4294901760
        %1005 = vmatpush.xpose.msra.mxu0 %v1004
        %v1006 = vand.u32 %v844, 4294901760
        %1007 = vmatmul.f32.gmra.mxu0 %v1006
        %v1008 = vpop.f32.mrf.mxu0
        %v1009 = vadd.f32 %v986, %v1008
        %1010 = vdwg.mxu0
        %v1011 = vld [vmem:[%s283] sm:$0xff]
        %v1012 = vld [vmem:[%s283 + $0x8] sm:$0xff]
        %v1013 = vld [vmem:[%s283 + $0x10] sm:$0xff]
        %v1014 = vld [vmem:[%s283 + $0x18] sm:$0xff]
        %v1015 = vsub.f32 %v505, %v1011
        %v1016 = vsub.f32 %v673, %v1012
        %v1017 = vsub.f32 %v841, %v1013
        %v1018 = vsub.f32 %v1009, %v1014
        %v1019 = vmul.f32 %v1015, %v1015
        %v1020 = vmul.f32 %v1016, %v1016
        %v1021 = vmul.f32 %v1017, %v1017
        %v1022 = vmul.f32 %v1018, %v1018
        %vm1023 = vcmask 130048
        %v1024 = vsel %vm1023, %v1019, 0.0
        %v1025 = vsel %vm1023, %v1020, 0.0
        %v1026 = vadd.f32 %v1024, %v1025
        %v1027 = vsel %vm1023, %v1021, 0.0
        %v1028 = vadd.f32 %v1026, %v1027
        %v1029 = vsel %vm1023, %v1022, 0.0
        %v1030 = vadd.f32 %v1028, %v1029
        %1031 = vadd.xlane.f32.xlu0 %v1030
        %v1032 = vpop.xlane.xlu0 %1031
        %v1033 = vrot.slane %v1032, 4
        %v1034 = vadd.f32 %v1032, %v1033
        %v1035 = vrot.slane %v1034, 2
        %v1036 = vadd.f32 %v1034, %v1035
        %v1037 = vrot.slane %v1036, 1
        %v1038 = vadd.f32 %v1036, %v1037
        %s1039 = vtos %v1038
        %v1040 = vstv %s1039
        %1041 = vst [vmem:[%s309] sm:$0xff] %v1040
        %s1042 = sand.u32 %s120, 1
        %s1043 = scalar_lea.sflag [#allocation5], %s1042
        %s1044 = sand.u32 %s120, 1
        %s1045 = smul.addr %s1044, 8
        %s1046 = scalar_lea.vmem [#allocation4], %s1045
        // Predicated region
        $region113: #{tpu_custom_call.1} parent=103 // pred_check
          %p1047 = pneg %p130
        $region114: #{tpu_custom_call.1} parent=103 // pred_check_branch
          %1049 = sbr.rel (%p1047) target = $region116
        $region115: #{tpu_custom_call.1} parent=103 // pred_region
          %1051 = vsyncadd %s1043, 0
          %s1052 = smul.addr %s18, 8
          %s1053 = scalar_lea.hbm %s4, %s1052
          %s1055 = sshll.u32 %s1046, 4
          %s1056 = int_to_ptr.vmem [resolvable:$true] %s1055
          %s1057 = sshll.u32 %s1053, 4
          %s1058 = int_to_ptr.hbm [resolvable:$true] %s1057
          %1060 = dma.vmem_to_hbm [thread:$0]  %s1056, 128, %s1058, %s1043
        $region116: #{tpu_custom_call.1} parent=103 // pred_fallthru
          _
      $region104: #{tpu_custom_call.1} parent=5 // pred_fallthru
        _
      %p1061 = scmp.le.s32.totalorder 2, %s13
      // Predicated region
      $region117: #{tpu_custom_call.1} parent=5 // pred_check
        %p1062 = pneg %p1061
      $region118: #{tpu_custom_call.1} parent=5 // pred_check_branch
        %1064 = sbr.rel (%p1062) target = $region120
      $region119: #{tpu_custom_call.1} parent=5 // pred_region
        %s1065 = ssub.s32 %s13, 2
        // Predicated region
        $region121: #{tpu_custom_call.1} parent=119 // pred_check
          %p1066 = pneg %p136
        $region122: #{tpu_custom_call.1} parent=119 // pred_check_branch
          %1068 = sbr.rel (%p1066) target = $region124
        $region123: #{tpu_custom_call.1} parent=119 // pred_region
          %s1069 = sand.u32 %s121, 1
          %s1070 = scalar_lea.sflag [#allocation5], %s1069
          %s1071 = sand.u32 %s121, 1
          %s1072 = smul.addr %s1071, 8
          %s1073 = scalar_lea.vmem [#allocation4], %s1072
          %1075 = dma.done %s1070, 128
        $region124: #{tpu_custom_call.1} parent=119 // pred_fallthru
          _
      $region120: #{tpu_custom_call.1} parent=5 // pred_fallthru
        _
    $region6: #{tpu_custom_call.1} parent=1 // loop_footer
      %s17 = sadd.s32 1, %s13
    $region7: #{tpu_custom_call.1} parent=1 // loop_footer_branch
      %12 = sbr.rel target = $region3
    $region8: #{tpu_custom_call.1} parent=1 // loop_exit
      _
    %1076 = vsyncpa [#allocation5], 1
    %s1077 = scalar_lea.sflag [#allocation5], 1
    %1078 = vsyncpa %s1077, 1

</llo_original>
